<compile_context>
chip_gen: v7x
topology: tpu7x:2x2x1
jax: 0.10.0
libtpu: 0.0.40
codegen_flags: <defaults>
</compile_context>

<pallas_src>
import functools

import jax
import jax.numpy as jnp
from jax.experimental import pallas as pl
from jax.experimental.pallas import tpu as pltpu


def _round_up(a, m):
    return ((a + m - 1) // m) * m


def _make_mlp_kernel(meta, use_bf16):
    """meta: static tuple of (d_out, d_in, mode, w_row, b_row) per layer."""
    n_linear = len(meta)
    cdt = jnp.bfloat16 if use_bf16 else jnp.float32

    def kernel(x_ref, p_ref, out_ref):
        # Batch lives on the lane axis: activations are (features, T).
        # NOTE: with an un-padded N the final block's tail lanes hold garbage;
        # every op below is lane-wise over the batch axis (feature reductions
        # run over sublanes only), so garbage never leaks into valid lanes and
        # the OOB output lanes are dropped on store.
        a = x_ref[...].astype(cdt)
        for li, (d_out, d_in, mode, w_row, b_row) in enumerate(meta):
            b = p_ref[b_row:b_row + d_out, 0:1]            # (d_out, 1): lane bcast
            if mode == "outer":
                # in_dim == 1: outer product, keep it on the VPU.
                w = p_ref[w_row:w_row + d_out, 0:1]        # (d_out, 1)
                z = w * a + b
            elif mode == "reduce":
                # out_dim == 1: VPU multiply + sublane (XLU) reduction, f32.
                w = p_ref[w_row:w_row + d_in, 0:1]         # (d_in, 1)
                z = jnp.sum(w * a, axis=0, keepdims=True) + b
            else:
                # Dense hidden layer on the MXU with f32 accumulation.
                w = p_ref[w_row:w_row + d_out, 0:d_in].astype(cdt)
                z = jnp.dot(w, a, preferred_element_type=jnp.float32) + b
            a = jnp.tanh(z.astype(cdt)) if li < n_linear - 1 else z
        out_ref[...] = a.astype(out_ref.dtype)

    return kernel


def prepare_params(torch_weights, torch_biases):
    """Pack PyTorch-layout params into ONE flat f32 buffer (single constant DMA).

    torch_weights[i]: (out_i, in_i)   (as stored by nn.Linear / P.__init__)
    torch_biases[i]:  (out_i,)

    Storage per layer inside the packed (rows, max_cols) buffer, row offsets
    8-aligned, column 0 holds narrow data:
      - "outer"  layers (in == 1):  w kept as (out, 1)
      - "reduce" layers (out == 1): w stored transposed as (in, 1)
      - "mxu"    layers:            w kept as (out, in)
      biases stored as (out, 1).

    Returns (packed_buffer, meta) with meta = static (out, in, mode, w_row, b_row).
    """
    entries, meta = [], []
    row, max_cols = 0, 1
    for w, b in zip(torch_weights, torch_biases):
        w = jnp.asarray(w, jnp.float32)
        b = jnp.asarray(b, jnp.float32)
        d_out, d_in = w.shape
        if d_in == 1 and d_out > 1:
            mode, kw = "outer", w                         # (d_out, 1)
        elif d_out == 1:
            mode, kw = "reduce", w.T                      # (d_in, 1)
        else:
            mode, kw = "mxu", w                           # (d_out, d_in)
        kb = b.reshape(d_out, 1)
        w_row = row
        row += _round_up(kw.shape[0], 8)
        b_row = row
        row += _round_up(d_out, 8)
        max_cols = max(max_cols, kw.shape[1])
        entries.append((kw, w_row, kb, b_row))
        meta.append((d_out, d_in, mode, w_row, b_row))
    buf = jnp.zeros((_round_up(row, 8), max_cols), jnp.float32)
    for kw, w_row, kb, b_row in entries:
        buf = buf.at[w_row:w_row + kw.shape[0], :kw.shape[1]].set(kw)
        buf = buf.at[b_row:b_row + kb.shape[0], :1].set(kb)
    return buf, tuple(meta)


def _choose_tile(N, tile_cols):
    # Small N: one grid step (per-step overhead dominates the tiny work).
    if N <= 4096:
        return _round_up(N, 128)
    # Large N: big lane tiles to amortize the ~0.35us/step overhead.  VMEM use
    # stays tiny ((32, 8192) f32 intermediates ~ 1 MiB).  With only a few
    # steps, round the step count to even so both v7x TensorCores get balanced
    # halves of the "parallel" grid axis.
    tc = min(_round_up(tile_cols, 128), 8192)
    steps = -(-N // tc)
    if 1 < steps <= 8 and steps % 2 == 1:
        tc = _round_up(-(-N // (steps + 1)), 128)
    return tc


@functools.partial(jax.jit, static_argnames=("meta", "tile_cols", "use_bf16"))
def rebano_forward(x, pbuf, *, meta, tile_cols=4096, use_bf16=False):
    """Forward pass of P (tanh MLP) as one Pallas kernel.

    x:        (N, layers[0]) float32
    pbuf:     packed param buffer from prepare_params
    meta:     static per-layer tuple from prepare_params
    use_bf16: bf16 hidden matmul + tanh (v6e/v7x large-N option; keep False on v5e)
    """
    N, d_in = x.shape
    d_out = meta[-1][0]

    # Batch on lanes: (d_in, N).  For the ReBaNO net d_in == 1, so this is a
    # free reshape (no extra HBM pass) and no zero-padding is materialized.
    if d_in == 1:
        xT = x.reshape(1, N)
    else:
        # TODO(synk): for d_in > 1 transpose the small (tc, d_in) tile in-kernel
        # instead of paying this HBM transpose pass.
        xT = x.T

    tc = _choose_tile(N, tile_cols)
    kernel = _make_mlp_kernel(meta, use_bf16)

    out = pl.pallas_call(
        kernel,
        out_shape=jax.ShapeDtypeStruct((d_out, N), jnp.float32),
        grid_spec=pltpu.PrefetchScalarGridSpec(
            num_scalar_prefetch=0,
            grid=(pl.cdiv(N, tc),),
            in_specs=[
                pl.BlockSpec((d_in, tc), lambda i: (0, i)),
                # Packed params: one tiny constant block, resident across the grid.
                pl.BlockSpec(pbuf.shape, lambda i: (0, 0)),
            ],
            out_specs=pl.BlockSpec((d_out, tc), lambda i: (0, i)),  # lane-dense
        ),
        compiler_params=pltpu.CompilerParams(
            dimension_semantics=("parallel",)),
    )(xT, pbuf)

    # Free reshape back to (N, d_out) for the scalar-output net.
    return out.reshape(N, 1) if d_out == 1 else out.T


def reference_forward(x, torch_ws, torch_bs):
    """Plain-JAX replication of P.forward (torch layout: x @ W.T + b)."""
    a = x
    n = len(torch_ws)
    for i in range(n - 1):
        a = jnp.tanh(a @ torch_ws[i].T + torch_bs[i])
    return a @ torch_ws[-1].T + torch_bs[-1]


if __name__ == "__main__":
    # ReBaNO activation network: scalar input -> tanh hidden layers -> scalar out.
    layers = [1, 32, 32, 1]
    N = 256  # collocation points

    key = jax.random.PRNGKey(0)
    key, kx = jax.random.split(key)
    x = jax.random.uniform(kx, (N, layers[0]), jnp.float32, minval=-1.0, maxval=1.0)

    # Deterministic synthetic parameters in PyTorch's native (out, in) layout,
    # mirroring P.__init__ (layer 0 weight is (layers[1], 1), last layer weight
    # is (layers[-1], layers[-2])).
    torch_ws, torch_bs = [], []
    for i in range(len(layers) - 1):
        key, kw, kb = jax.random.split(key, 3)
        torch_ws.append(
            jax.random.normal(kw, (layers[i + 1], layers[i]), jnp.float32) * 0.3)
        torch_bs.append(
            jax.random.normal(kb, (layers[i + 1],), jnp.float32) * 0.1)

    pbuf, meta = prepare_params(torch_ws, torch_bs)

    out = rebano_forward(x, pbuf, meta=meta)
    out = jax.block_until_ready(out)

    ref = reference_forward(x, torch_ws, torch_bs)
    assert out.shape == (N, layers[-1])
    assert jnp.allclose(out, ref, atol=2e-5, rtol=2e-5), "mismatch vs reference"

    print("KERNEL_OK")
</pallas_src>

<mosaic_0001>
module attributes {stable_mosaic.version = 11 : i64} {
  func.func @kernel(%arg0: i32, %arg1: memref<1x256xf32, #tpu.memory_space<vmem>>, %arg2: memref<168x32xf32, #tpu.memory_space<vmem>>, %arg3: memref<1x256xf32, #tpu.memory_space<vmem>>) attributes {dimension_semantics = [#tpu.dimension_semantics<parallel>], iteration_bounds = array<i64: 1>, scalar_prefetch = 0 : i64, scratch_operands = 0 : i64, tpu.core_type = #tpu.core_type<tc>, window_params = [{transform_indices = @transform_0, window_bounds = array<i64: 1, 256>}, {pipeline_mode = #tpu.pipeline_mode<synchronous>, transform_indices = @transform_1, window_bounds = array<i64: 168, 32>}, {transform_indices = @transform_2, window_bounds = array<i64: 1, 256>}]} {
    %c0 = arith.constant 0 : index
    %c0_0 = arith.constant 0 : index
    %0 = vector.load %arg1[%c0, %c0_0] : memref<1x256xf32, #tpu.memory_space<vmem>>, vector<1x256xf32>
    %c32 = arith.constant 32 : index
    %c0_1 = arith.constant 0 : index
    %1 = vector.load %arg2[%c32, %c0_1] : memref<168x32xf32, #tpu.memory_space<vmem>>, vector<32x1xf32>
    %c0_2 = arith.constant 0 : index
    %c0_3 = arith.constant 0 : index
    %2 = vector.load %arg2[%c0_2, %c0_3] : memref<168x32xf32, #tpu.memory_space<vmem>>, vector<32x1xf32>
    %3 = vector.broadcast %2 : vector<32x1xf32> to vector<32x256xf32>
    %4 = vector.broadcast %0 : vector<1x256xf32> to vector<32x256xf32>
    %5 = arith.mulf %3, %4 : vector<32x256xf32>
    %6 = vector.broadcast %1 : vector<32x1xf32> to vector<32x256xf32>
    %7 = arith.addf %5, %6 : vector<32x256xf32>
    %8 = math.tanh %7 : vector<32x256xf32>
    %c96 = arith.constant 96 : index
    %c0_4 = arith.constant 0 : index
    %9 = vector.load %arg2[%c96, %c0_4] : memref<168x32xf32, #tpu.memory_space<vmem>>, vector<32x1xf32>
    %c64 = arith.constant 64 : index
    %c0_5 = arith.constant 0 : index
    %10 = vector.load %arg2[%c64, %c0_5] : memref<168x32xf32, #tpu.memory_space<vmem>>, vector<32x32xf32>
    %cst = arith.constant dense<0.000000e+00> : vector<32x256xf32>
    %11 = tpu.matmul %10, %8, %cst {dimension_numbers = #tpu.dot_dimension_numbers<[1], [0], [0], [1], [0, 0, 1, 1], [], []>} : vector<32x32xf32>, vector<32x256xf32>, vector<32x256xf32> -> vector<32x256xf32>
    %12 = vector.broadcast %9 : vector<32x1xf32> to vector<32x256xf32>
    %13 = arith.addf %11, %12 : vector<32x256xf32>
    %14 = math.tanh %13 : vector<32x256xf32>
    %c160 = arith.constant 160 : index
    %c0_6 = arith.constant 0 : index
    %15 = vector.load %arg2[%c160, %c0_6] : memref<168x32xf32, #tpu.memory_space<vmem>>, vector<1x1xf32>
    %c128 = arith.constant 128 : index
    %c0_7 = arith.constant 0 : index
    %16 = vector.load %arg2[%c128, %c0_7] : memref<168x32xf32, #tpu.memory_space<vmem>>, vector<32x1xf32>
    %17 = vector.broadcast %16 : vector<32x1xf32> to vector<32x256xf32>
    %18 = arith.mulf %17, %14 : vector<32x256xf32>
    %cst_8 = arith.constant dense<0.000000e+00> : vector<256xf32>
    %19 = vector.multi_reduction <add>, %18, %cst_8 [0] : vector<32x256xf32> to vector<256xf32>
    %20 = vector.shape_cast %19 : vector<256xf32> to vector<1x256xf32>
    %21 = vector.broadcast %15 : vector<1x1xf32> to vector<1x256xf32>
    %22 = arith.addf %20, %21 : vector<1x256xf32>
    %c0_9 = arith.constant 0 : index
    %c0_10 = arith.constant 0 : index
    %23 = vector.load %arg3[%c0_9, %c0_10] : memref<1x256xf32, #tpu.memory_space<vmem>>, vector<1x256xf32>
    tpu.vector_store %arg3[%c0_9, %c0_10], %22 {strides = array<i32>} : memref<1x256xf32, #tpu.memory_space<vmem>>, vector<1x256xf32>,
    return
  }
  func.func @transform_0(%arg0: i32) -> (i32, i32) {
    %c0_i32 = arith.constant 0 : i32
    %c0_i32_0 = arith.constant 0 : i32
    return %c0_i32, %arg0 : i32, i32
  }
  func.func @transform_1(%arg0: i32) -> (i32, i32) {
    %c0_i32 = arith.constant 0 : i32
    %c0_i32_0 = arith.constant 0 : i32
    %c0_i32_1 = arith.constant 0 : i32
    return %c0_i32, %c0_i32_0 : i32, i32
  }
  func.func @transform_2(%arg0: i32) -> (i32, i32) {
    %c0_i32 = arith.constant 0 : i32
    %c0_i32_0 = arith.constant 0 : i32
    return %c0_i32, %arg0 : i32, i32
  }
}

</mosaic_0001>

<llo_original>
// kernel: rebano_forward.1
$region0: #{rebano_forward.1}
  #allocation0 [shape = 'u32[]', space=smem, size = 0x4, offset = 0x4, fixed_abs, tag = 'smem constant byte address 0x4 - core index']
  #allocation1 [shape = 'u32[144,128]{1,0:T(1,128)}', space=vmem, size = 0x12000, scoped, tag = 'internal scratch']
  %s0 = inlined_call_operand.vmem [shape: f32[1,256], index: 0, kind: input, shape index: {}]
  %s1 = inlined_call_operand.vmem [shape: f32[168,32], index: 1, kind: input, shape index: {}]
  %s2 = inlined_call_operand.hbm [shape: f32[1,256], index: 2, kind: output, shape index: {}]
  %s3 = sld [smem:[#allocation0]]
  $region18: #{rebano_forward.1} parent=0
    _
  %s5 = ssub.s32 1, %s3
  %s6 = scalar_select 0, %s5, %s3
  $region1: #{rebano_forward.1} parent=0
    #allocation2 [shape = 'u8[1024]{0}', space=vmem, size = 0x400, scoped, tag = 'output window, operand 0, single buffered']
    #allocation3 [shape = 's32[1]{0}', space=sflag, size = 0x4, scoped, tag = 'scoped memory for rebano_forward.1']
    %7 = vsyncpa [#allocation3], 0
    // Predicated region
    $region2: #{rebano_forward.1} parent=1 // pred_check
      _
    $region3: #{rebano_forward.1} parent=1 // pred_check_branch
      %9 = sbr.rel (0) target = $region5
    $region4: #{rebano_forward.1} parent=1 // pred_region
      _
    $region5: #{rebano_forward.1} parent=1 // pred_fallthru
      _
    // Predicated region
    $region6: #{rebano_forward.1} parent=1 // pred_check
      _
    $region7: #{rebano_forward.1} parent=1 // pred_check_branch
      %11 = sbr.rel (0) target = $region9
    $region8: #{rebano_forward.1} parent=1 // pred_region
      _
    $region9: #{rebano_forward.1} parent=1 // pred_fallthru
      _
    %v12 = vld [vmem:[%s0] sm:$0x3]
    %v13 = vld [vmem:[%s1 + $0x20] sm:$0xff]
    %v14 = vld [vmem:[%s1 + $0x28] sm:$0xff]
    %v15 = vld [vmem:[%s1 + $0x30] sm:$0xff]
    %v16 = vld [vmem:[%s1 + $0x38] sm:$0xff]
    %v17 = vld [vmem:[%s1] sm:$0xff]
    %v18 = vld [vmem:[%s1 + $0x8] sm:$0xff]
    %v19 = vld [vmem:[%s1 + $0x10] sm:$0xff]
    %v20 = vld [vmem:[%s1 + $0x18] sm:$0xff]
    %22 = vset.pattern.permute.xlu0 0
    %23 = vperm.xlu0 %22, %v17
    %v24 = vpop.permute.xlu0 %23
    %27 = vset.pattern.permute.xlu0 0
    %28 = vperm.xlu0 %27, %v18
    %v29 = vpop.permute.xlu0 %28
    %32 = vset.pattern.permute.xlu0 0
    %33 = vperm.xlu0 %32, %v19
    %v34 = vpop.permute.xlu0 %33
    %37 = vset.pattern.permute.xlu0 0
    %38 = vperm.xlu0 %37, %v20
    %v39 = vpop.permute.xlu0 %38
    %v42 = vlaneseq
    %v43 = vshrl.u32 %v42, 7
    %v44 = vsub.s32 0, %v43
    %v45 = vrot.slane %v12, %v44
    %v46 = vlaneseq
    %v47 = vshrl.u32 %v46, 7
    %v48 = vsub.s32 1, %v47
    %v49 = vrot.slane %v12, %v48
    %v52 = vmul.f32 %v24, %v45
    %v53 = vmul.f32 %v24, %v49
    %v54 = vmul.f32 %v29, %v45
    %v55 = vmul.f32 %v29, %v49
    %v56 = vmul.f32 %v34, %v45
    %v57 = vmul.f32 %v34, %v49
    %v58 = vmul.f32 %v39, %v45
    %v59 = vmul.f32 %v39, %v49
    %61 = vset.pattern.permute.xlu0 0
    %62 = vperm.xlu0 %61, %v13
    %v63 = vpop.permute.xlu0 %62
    %66 = vset.pattern.permute.xlu0 0
    %67 = vperm.xlu0 %66, %v14
    %v68 = vpop.permute.xlu0 %67
    %71 = vset.pattern.permute.xlu0 0
    %72 = vperm.xlu0 %71, %v15
    %v73 = vpop.permute.xlu0 %72
    %76 = vset.pattern.permute.xlu0 0
    %77 = vperm.xlu0 %76, %v16
    %v78 = vpop.permute.xlu0 %77
    %v80 = vadd.f32 %v52, %v63
    %v81 = vadd.f32 %v53, %v63
    %v82 = vadd.f32 %v54, %v68
    %v83 = vadd.f32 %v55, %v68
    %v84 = vadd.f32 %v56, %v73
    %v85 = vadd.f32 %v57, %v73
    %v86 = vadd.f32 %v58, %v78
    %v87 = vadd.f32 %v59, %v78
    %v88 = vtanh.pop %v80
    %v89 = vtanh.pop %v81
    %v90 = vtanh.pop %v82
    %v91 = vtanh.pop %v83
    %v92 = vtanh.pop %v84
    %v93 = vtanh.pop %v85
    %v94 = vtanh.pop %v86
    %v95 = vtanh.pop %v87
    %v96 = vld [vmem:[%s1 + $0x60] sm:$0xff]
    %v97 = vld [vmem:[%s1 + $0x68] sm:$0xff]
    %v98 = vld [vmem:[%s1 + $0x70] sm:$0xff]
    %v99 = vld [vmem:[%s1 + $0x78] sm:$0xff]
    %v100 = vld [vmem:[%s1 + $0x40] sm:$0xff]
    %v101 = vld [vmem:[%s1 + $0x48] sm:$0xff]
    %v102 = vld [vmem:[%s1 + $0x50] sm:$0xff]
    %v103 = vld [vmem:[%s1 + $0x58] sm:$0xff]
    %105 = vset.pattern.permute.xlu0 0
    %106 = vperm.xlu0 %105, %v96
    %v107 = vpop.permute.xlu0 %106
    %110 = vset.pattern.permute.xlu0 0
    %111 = vperm.xlu0 %110, %v97
    %v112 = vpop.permute.xlu0 %111
    %115 = vset.pattern.permute.xlu0 0
    %116 = vperm.xlu0 %115, %v98
    %v117 = vpop.permute.xlu0 %116
    %120 = vset.pattern.permute.xlu0 0
    %121 = vperm.xlu0 %120, %v99
    %v122 = vpop.permute.xlu0 %121
    %vm124 = vcmask 261120
    %v126 = vsel %vm124, %v100, 0
    %v129 = vsel %vm124, %v101, 0
    %v132 = vsel %vm124, %v102, 0
    %v135 = vsel %vm124, %v103, 0
    %137 = vmatprep.subr.mxu0 %v89
    %138 = vmatpush1.msra.mxu0 %v88
    %139 = vmatprep.subr.mxu0 %v91
    %140 = vmatpush1.msra.mxu0 %v90
    %141 = vmatprep.subr.mxu0 %v93
    %142 = vmatpush1.msra.mxu0 %v92
    %143 = vmatprep.subr.mxu0 %v95
    %144 = vmatpush1.msra.mxu0 %v94
    %145 = vmatprep.subr.mxu0 0.0
    %146 = vmatpush1.msra.mxu0 0.0
    %147 = vmatprep.subr.mxu0 0.0
    %148 = vmatpush1.msra.mxu0 0.0
    %149 = vmatprep.subr.mxu0 0.0
    %150 = vmatpush1.msra.mxu0 0.0
    %151 = vmatprep.subr.mxu0 0.0
    %152 = vmatpush1.msra.mxu0 0.0
    %153 = vmatprep.subr.mxu0 0.0
    %154 = vmatpush1.msra.mxu0 0.0
    %155 = vmatprep.subr.mxu0 0.0
    %156 = vmatpush1.msra.mxu0 0.0
    %157 = vmatprep.subr.mxu0 0.0
    %158 = vmatpush1.msra.mxu0 0.0
    %159 = vmatprep.subr.mxu0 0.0
    %160 = vmatpush1.msra.mxu0 0.0
    %161 = vmatprep.subr.mxu0 0.0
    %162 = vmatpush1.msra.mxu0 0.0
    %163 = vmatprep.subr.mxu0 0.0
    %164 = vmatpush1.msra.mxu0 0.0
    %165 = vmatprep.subr.mxu0 0.0
    %166 = vmatpush1.msra.mxu0 0.0
    %167 = vmatprep.subr.mxu0 0.0
    %168 = vmatpush1.msra.mxu0 0.0
    %169 = vmatprep.subr.mxu0 0.0
    %170 = vmatpush1.msra.mxu0 0.0
    %171 = vmatprep.subr.mxu0 0.0
    %172 = vmatpush1.msra.mxu0 0.0
    %173 = vmatprep.subr.mxu0 0.0
    %174 = vmatpush1.msra.mxu0 0.0
    %175 = vmatprep.subr.mxu0 0.0
    %176 = vmatpush1.msra.mxu0 0.0
    %177 = vmatprep.subr.mxu0 0.0
    %178 = vmatpush1.msra.mxu0 0.0
    %179 = vmatprep.subr.mxu0 0.0
    %180 = vmatpush1.msra.mxu0 0.0
    %181 = vmatprep.subr.mxu0 0.0
    %182 = vmatpush1.msra.mxu0 0.0
    %183 = vmatprep.subr.mxu0 0.0
    %184 = vmatpush1.msra.mxu0 0.0
    %185 = vmatprep.subr.mxu0 0.0
    %186 = vmatpush1.msra.mxu0 0.0
    %187 = vmatprep.subr.mxu0 0.0
    %188 = vmatpush1.msra.mxu0 0.0
    %189 = vmatprep.subr.mxu0 0.0
    %190 = vmatpush1.msra.mxu0 0.0
    %191 = vmatprep.subr.mxu0 0.0
    %192 = vmatpush1.msra.mxu0 0.0
    %193 = vmatprep.subr.mxu0 0.0
    %194 = vmatpush1.msra.mxu0 0.0
    %195 = vmatprep.subr.mxu0 0.0
    %196 = vmatpush1.msra.mxu0 0.0
    %197 = vmatprep.subr.mxu0 0.0
    %198 = vmatpush1.msra.mxu0 0.0
    %199 = vmatprep.subr.mxu0 0.0
    %200 = vmatpush1.msra.mxu0 0.0
    %201 = vmatprep.mubr.f32.mxu0 0.0
    %202 = vmatmul.mubr.f32.gmra.mrb[0].mxu0 %v126
    %v203 = vpop.f32.mrb[0].mxu0
    %v204 = vadd.f32 %v107, %v203
    %v205 = vpop.f32.mrb[0].mxu0
    %v206 = vadd.f32 %v107, %v205
    %207 = vmatprep.mubr.f32.mxu0 0.0
    %208 = vmatmul.mubr.f32.gmra.mrb[0].mxu0 %v129
    %v209 = vpop.f32.mrb[0].mxu0
    %v210 = vadd.f32 %v112, %v209
    %v211 = vpop.f32.mrb[0].mxu0
    %v212 = vadd.f32 %v112, %v211
    %213 = vmatprep.mubr.f32.mxu0 0.0
    %214 = vmatmul.mubr.f32.gmra.mrb[0].mxu0 %v132
    %v215 = vpop.f32.mrb[0].mxu0
    %v216 = vadd.f32 %v117, %v215
    %v217 = vpop.f32.mrb[0].mxu0
    %v218 = vadd.f32 %v117, %v217
    %219 = vmatprep.mubr.f32.mxu0 0.0
    %220 = vmatmul.mubr.f32.gmra.mrb[0].mxu0 %v135
    %v221 = vpop.f32.mrb[0].mxu0
    %v222 = vadd.f32 %v122, %v221
    %v223 = vpop.f32.mrb[0].mxu0
    %v224 = vadd.f32 %v122, %v223
    %225 = vdwg.mxu0
    %v226 = vtanh.pop %v204
    %v227 = vtanh.pop %v206
    %v228 = vtanh.pop %v210
    %v229 = vtanh.pop %v212
    %v230 = vtanh.pop %v216
    %v231 = vtanh.pop %v218
    %v232 = vtanh.pop %v222
    %v233 = vtanh.pop %v224
    %v234 = vld [vmem:[%s1 + $0xa0] sm:$0x1]
    %v235 = vld [vmem:[%s1 + $0x80] sm:$0xff]
    %v236 = vld [vmem:[%s1 + $0x88] sm:$0xff]
    %v237 = vld [vmem:[%s1 + $0x90] sm:$0xff]
    %v238 = vld [vmem:[%s1 + $0x98] sm:$0xff]
    %240 = vset.pattern.permute.xlu0 0
    %241 = vperm.xlu0 %240, %v235
    %v242 = vpop.permute.xlu0 %241
    %245 = vset.pattern.permute.xlu0 0
    %246 = vperm.xlu0 %245, %v236
    %v247 = vpop.permute.xlu0 %246
    %250 = vset.pattern.permute.xlu0 0
    %251 = vperm.xlu0 %250, %v237
    %v252 = vpop.permute.xlu0 %251
    %255 = vset.pattern.permute.xlu0 0
    %256 = vperm.xlu0 %255, %v238
    %v257 = vpop.permute.xlu0 %256
    %v259 = vmul.f32 %v242, %v226
    %v260 = vmul.f32 %v242, %v227
    %v261 = vmul.f32 %v247, %v228
    %v262 = vmul.f32 %v247, %v229
    %v263 = vmul.f32 %v252, %v230
    %v264 = vmul.f32 %v252, %v231
    %v265 = vmul.f32 %v257, %v232
    %v266 = vmul.f32 %v257, %v233
    %v267 = vadd.f32 %v259, %v261
    %v268 = vadd.f32 %v267, %v263
    %v269 = vadd.f32 %v268, %v265
    %v270 = vrot.slane %v269, 4
    %v271 = vadd.f32 %v269, %v270
    %v272 = vrot.slane %v271, 2
    %v273 = vadd.f32 %v271, %v272
    %v274 = vrot.slane %v273, 1
    %v275 = vadd.f32 %v273, %v274
    %v276 = vadd.f32 %v260, %v262
    %v277 = vadd.f32 %v276, %v264
    %v278 = vadd.f32 %v277, %v266
    %v279 = vrot.slane %v278, 4
    %v280 = vadd.f32 %v278, %v279
    %v281 = vrot.slane %v280, 2
    %v282 = vadd.f32 %v280, %v281
    %v283 = vrot.slane %v282, 1
    %v284 = vadd.f32 %v282, %v283
    %286 = vset.pattern.permute.xlu0 0
    %287 = vperm.xlu0 %286, %v234
    %v288 = vpop.permute.xlu0 %287
    %v290 = vadd.f32 %v275, %v288
    %v291 = vadd.f32 %v284, %v288
    %v294 = vcombine.low %v290, %v291
    %v296 = vunpack.c.l.s4 1966171168
    %v297 = vunpack.c.0.s8 %v296
    %v298 = vlaneseq
    %v299 = vshrl.u32 %v298, 7
    %v300 = vsub.s32 %v297, %v299
    %v301 = vrot.slane %v294, %v300
    %v303 = vunpack.c.l.s4 1966171168
    %v304 = vunpack.c.0.s8 %v303
    %v305 = vlaneseq
    %v306 = vshrl.u32 %v305, 7
    %v307 = vsub.s32 %v304, %v306
    %v308 = vrot.slane %v301, %v307
    %v310 = vlaneseq
    %vm311 = vcmp.ge.s32.totalorder %v310, 0
    %vm312 = vcmp.lt.s32.totalorder %v310, 256
    %vm313 = vmand %vm311, %vm312
    %314 = vst.msk [vmem:[#allocation2] sm:$0x3] %vm313, %v308
    // Predicated region
    $region10: #{rebano_forward.1} parent=1 // pred_check
      _
    $region11: #{rebano_forward.1} parent=1 // pred_check_branch
      %316 = sbr.rel (0) target = $region13
    $region12: #{rebano_forward.1} parent=1 // pred_region
      %s318 = ssub.s32 32, 32
      %319 = vsyncadd [#allocation3], %s318
      %s321 = sshll.u32 [#allocation2], 4
      %s322 = int_to_ptr.vmem [resolvable:$true] %s321
      %324 = dma.vmem_to_hbm [thread:$0]  %s322, 32, %s2, [#allocation3]
    $region13: #{rebano_forward.1} parent=1 // pred_fallthru
      _
    // Predicated region
    $region14: #{rebano_forward.1} parent=1 // pred_check
      _
    $region15: #{rebano_forward.1} parent=1 // pred_check_branch
      %326 = sbr.rel (0) target = $region17
    $region16: #{rebano_forward.1} parent=1 // pred_region
      %327 = dma.done [#allocation3], 32
    $region17: #{rebano_forward.1} parent=1 // pred_fallthru
      _
    %328 = vsyncpa [#allocation3], 1

</llo_original>
